<compile_context>
chip_gen: v7x
topology: tpu7x:2x2x1
jax: 0.10.0
libtpu: 0.0.40
codegen_flags: <defaults>
</compile_context>

<pallas_src>
import jax
import jax.numpy as jnp
from jax.experimental import pallas as pl
from jax.experimental.pallas import tpu as pltpu

H_PAD = 128   # padded hidden width (real: 24)
O_PAD = 128   # padded output width (real: 10), lane-dense store
D_IN = 784


def mlp_kernel(x_ref, w1_ref, b1_ref, w2_ref, b2_ref, w3_ref, b3_ref, o_ref):
    # hidden1 + ReLU  (MXU matmul, f32 accumulation)
    h1 = jnp.dot(x_ref[...], w1_ref[...], preferred_element_type=jnp.float32)
    h1 = jnp.maximum(h1 + b1_ref[...], 0.0)
    # hidden2 + ReLU
    h2 = jnp.dot(h1, w2_ref[...], preferred_element_type=jnp.float32)
    h2 = jnp.maximum(h2 + b2_ref[...], 0.0)
    # output (no activation); padded lanes stay exactly zero
    out = jnp.dot(h2, w3_ref[...], preferred_element_type=jnp.float32)
    o_ref[...] = (out + b3_ref[...]).astype(o_ref.dtype)


def _pad2(a, rows, cols):
    return jnp.zeros((rows, cols), jnp.float32).at[: a.shape[0], : a.shape[1]].set(a)


def feedforward_mnist(x, params, *, bm=1024):
    """x: (B, 784) float32. params: (in,out) weights and (1,out) biases.

    Returns (B, 10) float32 logits.
    """
    B, d_in = x.shape
    assert d_in == D_IN

    # --- pad parameters once (zero padding is exact through ReLU / matmul) ---
    w1p = _pad2(params["w1"], D_IN, H_PAD)
    b1p = _pad2(params["b1"], 1, H_PAD)
    w2p = _pad2(params["w2"], H_PAD, H_PAD)
    b2p = _pad2(params["b2"], 1, H_PAD)
    w3p = _pad2(params["w3"], H_PAD, O_PAD)
    b3p = _pad2(params["b3"], 1, O_PAD)

    # --- choose batch tile: single block for small B, big tiles otherwise ---
    if B <= bm:
        bm_eff = max(8, ((B + 7) // 8) * 8)      # whole batch in one grid step
    else:
        bm_eff = bm
    B_pad = ((B + bm_eff - 1) // bm_eff) * bm_eff
    if B_pad != B:
        x = jnp.zeros((B_pad, D_IN), x.dtype).at[:B].set(x)

    grid = (B_pad // bm_eff,)
    const = lambda shape: pl.BlockSpec(shape, lambda i: (0, 0))  # resident in VMEM

    out_padded = pl.pallas_call(
        mlp_kernel,
        out_shape=jax.ShapeDtypeStruct((B_pad, O_PAD), jnp.float32),
        grid_spec=pl.GridSpec(
            grid=grid,
            in_specs=[
                pl.BlockSpec((bm_eff, D_IN), lambda i: (i, 0)),   # stream x over batch
                const((D_IN, H_PAD)), const((1, H_PAD)),
                const((H_PAD, H_PAD)), const((1, H_PAD)),
                const((H_PAD, O_PAD)), const((1, O_PAD)),
            ],
            out_specs=pl.BlockSpec((bm_eff, O_PAD), lambda i: (i, 0)),
        ),
        compiler_params=pltpu.CompilerParams(
            dimension_semantics=("parallel",)),   # megacore-shardable batch axis
    )(x, w1p, b1p, w2p, b2p, w3p, b3p)

    return out_padded[:B, :10]


def init_params(key):
    """Deterministic init matching PyTorch Linear shapes (stored transposed)."""
    def linear_init(k, fan_in, fan_out):
        kw, kb = jax.random.split(k)
        bound = 1.0 / jnp.sqrt(fan_in)
        w = jax.random.uniform(kw, (fan_in, fan_out), jnp.float32, -bound, bound)
        b = jax.random.uniform(kb, (1, fan_out), jnp.float32, -bound, bound)
        return w, b

    k1, k2, k3 = jax.random.split(key, 3)
    w1, b1 = linear_init(k1, 784, 24)
    w2, b2 = linear_init(k2, 24, 24)
    w3, b3 = linear_init(k3, 24, 10)
    return dict(w1=w1, b1=b1, w2=w2, b2=b2, w3=w3, b3=b3)


def reference(x, p):
    h1 = jnp.maximum(x @ p["w1"] + p["b1"], 0.0)
    h2 = jnp.maximum(h1 @ p["w2"] + p["b2"], 0.0)
    return h2 @ p["w3"] + p["b3"]


if __name__ == "__main__":
    key = jax.random.PRNGKey(0)
    kx, kp = jax.random.split(key)

    B = 16
    x = jax.random.normal(kx, (B, 784), dtype=jnp.float32)
    params = init_params(kp)

    out = feedforward_mnist(x, params)
    out = jax.block_until_ready(out)

    ref = reference(x, params)
    assert out.shape == (B, 10)
    assert jnp.allclose(out, ref, atol=1e-5, rtol=1e-5)

    print("KERNEL_OK")
</pallas_src>

<mosaic_0001>
module attributes {stable_mosaic.version = 11 : i64} {
  func.func @mlp_kernel(%arg0: i32, %arg1: memref<16x784xf32, #tpu.memory_space<vmem>>, %arg2: memref<784x128xf32, #tpu.memory_space<vmem>>, %arg3: memref<1x128xf32, #tpu.memory_space<vmem>>, %arg4: memref<128x128xf32, #tpu.memory_space<vmem>>, %arg5: memref<1x128xf32, #tpu.memory_space<vmem>>, %arg6: memref<128x128xf32, #tpu.memory_space<vmem>>, %arg7: memref<1x128xf32, #tpu.memory_space<vmem>>, %arg8: memref<16x128xf32, #tpu.memory_space<vmem>>) attributes {dimension_semantics = [#tpu.dimension_semantics<parallel>], iteration_bounds = array<i64: 1>, scalar_prefetch = 0 : i64, scratch_operands = 0 : i64, tpu.core_type = #tpu.core_type<tc>, window_params = [{transform_indices = @transform_0, window_bounds = array<i64: 16, 784>}, {pipeline_mode = #tpu.pipeline_mode<synchronous>, transform_indices = @transform_1, window_bounds = array<i64: 784, 128>}, {pipeline_mode = #tpu.pipeline_mode<synchronous>, transform_indices = @transform_2, window_bounds = array<i64: 1, 128>}, {pipeline_mode = #tpu.pipeline_mode<synchronous>, transform_indices = @transform_3, window_bounds = array<i64: 128, 128>}, {pipeline_mode = #tpu.pipeline_mode<synchronous>, transform_indices = @transform_4, window_bounds = array<i64: 1, 128>}, {pipeline_mode = #tpu.pipeline_mode<synchronous>, transform_indices = @transform_5, window_bounds = array<i64: 128, 128>}, {pipeline_mode = #tpu.pipeline_mode<synchronous>, transform_indices = @transform_6, window_bounds = array<i64: 1, 128>}, {transform_indices = @transform_7, window_bounds = array<i64: 16, 128>}]} {
    %c0 = arith.constant 0 : index
    %c0_0 = arith.constant 0 : index
    %0 = vector.load %arg1[%c0, %c0_0] : memref<16x784xf32, #tpu.memory_space<vmem>>, vector<16x784xf32>
    %c0_1 = arith.constant 0 : index
    %c0_2 = arith.constant 0 : index
    %1 = vector.load %arg2[%c0_1, %c0_2] : memref<784x128xf32, #tpu.memory_space<vmem>>, vector<784x128xf32>
    %cst = arith.constant dense<0.000000e+00> : vector<16x128xf32>
    %2 = tpu.matmul %0, %1, %cst {dimension_numbers = #tpu.dot_dimension_numbers<[1], [0], [0], [1], [0, 0, 1, 1], [], []>} : vector<16x784xf32>, vector<784x128xf32>, vector<16x128xf32> -> vector<16x128xf32>
    %c0_3 = arith.constant 0 : index
    %c0_4 = arith.constant 0 : index
    %3 = vector.load %arg3[%c0_3, %c0_4] : memref<1x128xf32, #tpu.memory_space<vmem>>, vector<1x128xf32>
    %4 = vector.broadcast %3 : vector<1x128xf32> to vector<16x128xf32>
    %5 = arith.addf %2, %4 : vector<16x128xf32>
    %cst_5 = arith.constant 0.000000e+00 : f32
    %6 = vector.broadcast %cst_5 : f32 to vector<16x128xf32>
    %7 = arith.maximumf %5, %6 : vector<16x128xf32>
    %c0_6 = arith.constant 0 : index
    %c0_7 = arith.constant 0 : index
    %8 = vector.load %arg4[%c0_6, %c0_7] : memref<128x128xf32, #tpu.memory_space<vmem>>, vector<128x128xf32>
    %cst_8 = arith.constant dense<0.000000e+00> : vector<16x128xf32>
    %9 = tpu.matmul %7, %8, %cst_8 {dimension_numbers = #tpu.dot_dimension_numbers<[1], [0], [0], [1], [0, 0, 1, 1], [], []>} : vector<16x128xf32>, vector<128x128xf32>, vector<16x128xf32> -> vector<16x128xf32>
    %c0_9 = arith.constant 0 : index
    %c0_10 = arith.constant 0 : index
    %10 = vector.load %arg5[%c0_9, %c0_10] : memref<1x128xf32, #tpu.memory_space<vmem>>, vector<1x128xf32>
    %11 = vector.broadcast %10 : vector<1x128xf32> to vector<16x128xf32>
    %12 = arith.addf %9, %11 : vector<16x128xf32>
    %cst_11 = arith.constant 0.000000e+00 : f32
    %13 = vector.broadcast %cst_11 : f32 to vector<16x128xf32>
    %14 = arith.maximumf %12, %13 : vector<16x128xf32>
    %c0_12 = arith.constant 0 : index
    %c0_13 = arith.constant 0 : index
    %15 = vector.load %arg6[%c0_12, %c0_13] : memref<128x128xf32, #tpu.memory_space<vmem>>, vector<128x128xf32>
    %cst_14 = arith.constant dense<0.000000e+00> : vector<16x128xf32>
    %16 = tpu.matmul %14, %15, %cst_14 {dimension_numbers = #tpu.dot_dimension_numbers<[1], [0], [0], [1], [0, 0, 1, 1], [], []>} : vector<16x128xf32>, vector<128x128xf32>, vector<16x128xf32> -> vector<16x128xf32>
    %c0_15 = arith.constant 0 : index
    %c0_16 = arith.constant 0 : index
    %17 = vector.load %arg7[%c0_15, %c0_16] : memref<1x128xf32, #tpu.memory_space<vmem>>, vector<1x128xf32>
    %18 = vector.broadcast %17 : vector<1x128xf32> to vector<16x128xf32>
    %19 = arith.addf %16, %18 : vector<16x128xf32>
    %c0_17 = arith.constant 0 : index
    %c0_18 = arith.constant 0 : index
    %20 = vector.load %arg8[%c0_17, %c0_18] : memref<16x128xf32, #tpu.memory_space<vmem>>, vector<16x128xf32>
    tpu.vector_store %arg8[%c0_17, %c0_18], %19 {strides = array<i32>} : memref<16x128xf32, #tpu.memory_space<vmem>>, vector<16x128xf32>,
    return
  }
  func.func @transform_0(%arg0: i32) -> (i32, i32) {
    %c0_i32 = arith.constant 0 : i32
    %c0_i32_0 = arith.constant 0 : i32
    return %arg0, %c0_i32 : i32, i32
  }
  func.func @transform_1(%arg0: i32) -> (i32, i32) {
    %c0_i32 = arith.constant 0 : i32
    %c0_i32_0 = arith.constant 0 : i32
    %c0_i32_1 = arith.constant 0 : i32
    return %c0_i32, %c0_i32_0 : i32, i32
  }
  func.func @transform_2(%arg0: i32) -> (i32, i32) {
    %c0_i32 = arith.constant 0 : i32
    %c0_i32_0 = arith.constant 0 : i32
    %c0_i32_1 = arith.constant 0 : i32
    return %c0_i32, %c0_i32_0 : i32, i32
  }
  func.func @transform_3(%arg0: i32) -> (i32, i32) {
    %c0_i32 = arith.constant 0 : i32
    %c0_i32_0 = arith.constant 0 : i32
    %c0_i32_1 = arith.constant 0 : i32
    return %c0_i32, %c0_i32_0 : i32, i32
  }
  func.func @transform_4(%arg0: i32) -> (i32, i32) {
    %c0_i32 = arith.constant 0 : i32
    %c0_i32_0 = arith.constant 0 : i32
    %c0_i32_1 = arith.constant 0 : i32
    return %c0_i32, %c0_i32_0 : i32, i32
  }
  func.func @transform_5(%arg0: i32) -> (i32, i32) {
    %c0_i32 = arith.constant 0 : i32
    %c0_i32_0 = arith.constant 0 : i32
    %c0_i32_1 = arith.constant 0 : i32
    return %c0_i32, %c0_i32_0 : i32, i32
  }
  func.func @transform_6(%arg0: i32) -> (i32, i32) {
    %c0_i32 = arith.constant 0 : i32
    %c0_i32_0 = arith.constant 0 : i32
    %c0_i32_1 = arith.constant 0 : i32
    return %c0_i32, %c0_i32_0 : i32, i32
  }
  func.func @transform_7(%arg0: i32) -> (i32, i32) {
    %c0_i32 = arith.constant 0 : i32
    %c0_i32_0 = arith.constant 0 : i32
    return %arg0, %c0_i32 : i32, i32
  }
}

</mosaic_0001>

<llo_original>
// kernel: tpu_custom_call.1
$region0: #{tpu_custom_call.1}
  #allocation0 [shape = 'u32[]', space=smem, size = 0x4, offset = 0x4, fixed_abs, tag = 'smem constant byte address 0x4 - core index']
  #allocation1 [shape = 'u32[144,128]{1,0:T(1,128)}', space=vmem, size = 0x12000, scoped, tag = 'internal scratch']
  %s0 = inlined_call_operand.hbm [shape: f32[16,784], index: 0, kind: input, shape index: {}]
  %s1 = inlined_call_operand.hbm [shape: f32[784,128], index: 1, kind: input, shape index: {}]
  %s2 = inlined_call_operand.vmem [shape: f32[1,128], index: 2, kind: input, shape index: {}]
  %s3 = inlined_call_operand.hbm [shape: f32[128,128], index: 3, kind: input, shape index: {}]
  %s4 = inlined_call_operand.vmem [shape: f32[1,128], index: 4, kind: input, shape index: {}]
  %s5 = inlined_call_operand.hbm [shape: f32[128,128], index: 5, kind: input, shape index: {}]
  %s6 = inlined_call_operand.vmem [shape: f32[1,128], index: 6, kind: input, shape index: {}]
  %s7 = inlined_call_operand.hbm [shape: f32[16,128], index: 7, kind: output, shape index: {}]
  %s8 = sld [smem:[#allocation0]]
  $region54: #{tpu_custom_call.1} parent=0
    _
  %s10 = ssub.s32 1, %s8
  %s11 = scalar_select 0, %s10, %s8
  $region1: #{tpu_custom_call.1} parent=0
    #allocation2 [shape = 'u8[57344]{0}', space=vmem, size = 0xe000, scoped, tag = 'input window, operand 0, single buffered']
    #allocation3 [shape = 's32[1]{0}', space=sflag, size = 0x4, scoped, tag = 'scoped memory for tpu_custom_call.1']
    #allocation4 [shape = 's32[1]{0}', space=sflag, size = 0x4, scoped, tag = 'scoped memory for tpu_custom_call.1']
    #allocation5 [shape = 'u8[401408]{0}', space=vmem, size = 0x62000, scoped, tag = 'input window, operand 1, single buffered']
    #allocation6 [shape = 's32[1]{0}', space=sflag, size = 0x4, scoped, tag = 'scoped memory for tpu_custom_call.1']
    #allocation7 [shape = 'u8[65536]{0}', space=vmem, size = 0x10000, scoped, tag = 'input window, operand 3, single buffered']
    #allocation8 [shape = 'u8[65536]{0}', space=vmem, size = 0x10000, scoped, tag = 'input window, operand 5, single buffered']
    #allocation9 [shape = 's32[1]{0}', space=sflag, size = 0x4, scoped, tag = 'scoped memory for tpu_custom_call.1']
    #allocation10 [shape = 'u8[8192]{0}', space=vmem, size = 0x2000, scoped, tag = 'output window, operand 0, single buffered']
    %12 = vsyncpa [#allocation3], 0
    %13 = vsyncpa [#allocation6], 0
    %14 = vsyncpa [#allocation9], 0
    %15 = vsyncpa [#allocation4], 0
    // Predicated region
    $region2: #{tpu_custom_call.1} parent=1 // pred_check
      _
    $region3: #{tpu_custom_call.1} parent=1 // pred_check_branch
      %17 = sbr.rel (0) target = $region5
    $region4: #{tpu_custom_call.1} parent=1 // pred_region
      %s19 = ssub.s32 1792, 1792
      %20 = vsyncadd [#allocation3], %s19
      %s21 = sshll.u32 [#allocation2], 4
      %s22 = int_to_ptr.vmem [resolvable:$true] %s21
      %27 = dma.hbm_to_vmem [thread:$0]  %s0, 1792, %s22, [#allocation3], 896, 896, 56
    $region5: #{tpu_custom_call.1} parent=1 // pred_fallthru
      _
    // Predicated region
    $region6: #{tpu_custom_call.1} parent=1 // pred_check
      _
    $region7: #{tpu_custom_call.1} parent=1 // pred_check_branch
      %29 = sbr.rel (0) target = $region9
    $region8: #{tpu_custom_call.1} parent=1 // pred_region
      %s31 = ssub.s32 12544, 12544
      %32 = vsyncadd [#allocation6], %s31
      %s33 = sshll.u32 [#allocation5], 4
      %s34 = int_to_ptr.vmem [resolvable:$true] %s33
      %39 = dma.hbm_to_vmem [thread:$0]  %s1, 12544, %s34, [#allocation6], 128, 128, 8
    $region9: #{tpu_custom_call.1} parent=1 // pred_fallthru
      _
    // Predicated region
    $region10: #{tpu_custom_call.1} parent=1 // pred_check
      _
    $region11: #{tpu_custom_call.1} parent=1 // pred_check_branch
      %41 = sbr.rel (0) target = $region13
    $region12: #{tpu_custom_call.1} parent=1 // pred_region
      _
    $region13: #{tpu_custom_call.1} parent=1 // pred_fallthru
      _
    // Predicated region
    $region14: #{tpu_custom_call.1} parent=1 // pred_check
      _
    $region15: #{tpu_custom_call.1} parent=1 // pred_check_branch
      %43 = sbr.rel (0) target = $region17
    $region16: #{tpu_custom_call.1} parent=1 // pred_region
      %s45 = ssub.s32 2048, 2048
      %46 = vsyncadd [#allocation6], %s45
      %s47 = sshll.u32 [#allocation7], 4
      %s48 = int_to_ptr.vmem [resolvable:$true] %s47
      %53 = dma.hbm_to_vmem [thread:$0]  %s3, 2048, %s48, [#allocation6], 128, 128, 8
    $region17: #{tpu_custom_call.1} parent=1 // pred_fallthru
      _
    // Predicated region
    $region18: #{tpu_custom_call.1} parent=1 // pred_check
      _
    $region19: #{tpu_custom_call.1} parent=1 // pred_check_branch
      %55 = sbr.rel (0) target = $region21
    $region20: #{tpu_custom_call.1} parent=1 // pred_region
      _
    $region21: #{tpu_custom_call.1} parent=1 // pred_fallthru
      _
    // Predicated region
    $region22: #{tpu_custom_call.1} parent=1 // pred_check
      _
    $region23: #{tpu_custom_call.1} parent=1 // pred_check_branch
      %57 = sbr.rel (0) target = $region25
    $region24: #{tpu_custom_call.1} parent=1 // pred_region
      %s59 = ssub.s32 2048, 2048
      %60 = vsyncadd [#allocation9], %s59
      %s61 = sshll.u32 [#allocation8], 4
      %s62 = int_to_ptr.vmem [resolvable:$true] %s61
      %67 = dma.hbm_to_vmem [thread:$0]  %s5, 2048, %s62, [#allocation9], 128, 128, 8
    $region25: #{tpu_custom_call.1} parent=1 // pred_fallthru
      _
    // Predicated region
    $region26: #{tpu_custom_call.1} parent=1 // pred_check
      _
    $region27: #{tpu_custom_call.1} parent=1 // pred_check_branch
      %69 = sbr.rel (0) target = $region29
    $region28: #{tpu_custom_call.1} parent=1 // pred_region
      _
    $region29: #{tpu_custom_call.1} parent=1 // pred_fallthru
      _
    // Predicated region
    $region30: #{tpu_custom_call.1} parent=1 // pred_check
      _
    $region31: #{tpu_custom_call.1} parent=1 // pred_check_branch
      %71 = sbr.rel (0) target = $region33
    $region32: #{tpu_custom_call.1} parent=1 // pred_region
      %72 = dma.done [#allocation3], 1792
    $region33: #{tpu_custom_call.1} parent=1 // pred_fallthru
      _
    // Predicated region
    $region34: #{tpu_custom_call.1} parent=1 // pred_check
      _
    $region35: #{tpu_custom_call.1} parent=1 // pred_check_branch
      %74 = sbr.rel (0) target = $region37
    $region36: #{tpu_custom_call.1} parent=1 // pred_region
      %75 = dma.done [#allocation6], 12544
    $region37: #{tpu_custom_call.1} parent=1 // pred_fallthru
      _
    // Predicated region
    $region38: #{tpu_custom_call.1} parent=1 // pred_check
      _
    $region39: #{tpu_custom_call.1} parent=1 // pred_check_branch
      %77 = sbr.rel (0) target = $region41
    $region40: #{tpu_custom_call.1} parent=1 // pred_region
      %78 = dma.done [#allocation6], 2048
    $region41: #{tpu_custom_call.1} parent=1 // pred_fallthru
      _
    // Predicated region
    $region42: #{tpu_custom_call.1} parent=1 // pred_check
      _
    $region43: #{tpu_custom_call.1} parent=1 // pred_check_branch
      %80 = sbr.rel (0) target = $region45
    $region44: #{tpu_custom_call.1} parent=1 // pred_region
      %81 = dma.done [#allocation9], 2048
    $region45: #{tpu_custom_call.1} parent=1 // pred_fallthru
      _
    %v82 = vld [vmem:[#allocation2] sm:$0xff]
    %v83 = vld [vmem:[#allocation2 + $0x8] sm:$0xff]
    %v84 = vld [vmem:[#allocation2 + $0x10] sm:$0xff]
    %v85 = vld [vmem:[#allocation2 + $0x18] sm:$0xff]
    %v86 = vld [vmem:[#allocation2 + $0x20] sm:$0xff]
    %v87 = vld [vmem:[#allocation2 + $0x28] sm:$0xff]
    %v88 = vld [vmem:[#allocation2 + $0x30] sm:$0xff]
    %v89 = vld [vmem:[#allocation2 + $0x38] sm:$0xff]
    %v90 = vld [vmem:[#allocation2 + $0x40] sm:$0xff]
    %v91 = vld [vmem:[#allocation2 + $0x48] sm:$0xff]
    %v92 = vld [vmem:[#allocation2 + $0x50] sm:$0xff]
    %v93 = vld [vmem:[#allocation2 + $0x58] sm:$0xff]
    %v94 = vld [vmem:[#allocation2 + $0x60] sm:$0xff]
    %v95 = vld [vmem:[#allocation2 + $0x68] sm:$0xff]
    %v96 = vld [vmem:[#allocation5] sm:$0xff]
    %v97 = vld [vmem:[#allocation5 + $0x8] sm:$0xff]
    %v98 = vld [vmem:[#allocation5 + $0x10] sm:$0xff]
    %v99 = vld [vmem:[#allocation5 + $0x18] sm:$0xff]
    %v100 = vld [vmem:[#allocation5 + $0x20] sm:$0xff]
    %v101 = vld [vmem:[#allocation5 + $0x28] sm:$0xff]
    %v102 = vld [vmem:[#allocation5 + $0x30] sm:$0xff]
    %v103 = vld [vmem:[#allocation5 + $0x38] sm:$0xff]
    %v104 = vld [vmem:[#allocation5 + $0x40] sm:$0xff]
    %v105 = vld [vmem:[#allocation5 + $0x48] sm:$0xff]
    %v106 = vld [vmem:[#allocation5 + $0x50] sm:$0xff]
    %v107 = vld [vmem:[#allocation5 + $0x58] sm:$0xff]
    %v108 = vld [vmem:[#allocation5 + $0x60] sm:$0xff]
    %v109 = vld [vmem:[#allocation5 + $0x68] sm:$0xff]
    %v110 = vld [vmem:[#allocation5 + $0x70] sm:$0xff]
    %v111 = vld [vmem:[#allocation5 + $0x78] sm:$0xff]
    %v112 = vld [vmem:[#allocation5 + $0x80] sm:$0xff]
    %v113 = vld [vmem:[#allocation5 + $0x88] sm:$0xff]
    %v114 = vld [vmem:[#allocation5 + $0x90] sm:$0xff]
    %v115 = vld [vmem:[#allocation5 + $0x98] sm:$0xff]
    %v116 = vld [vmem:[#allocation5 + $0xa0] sm:$0xff]
    %v117 = vld [vmem:[#allocation5 + $0xa8] sm:$0xff]
    %v118 = vld [vmem:[#allocation5 + $0xb0] sm:$0xff]
    %v119 = vld [vmem:[#allocation5 + $0xb8] sm:$0xff]
    %v120 = vld [vmem:[#allocation5 + $0xc0] sm:$0xff]
    %v121 = vld [vmem:[#allocation5 + $0xc8] sm:$0xff]
    %v122 = vld [vmem:[#allocation5 + $0xd0] sm:$0xff]
    %v123 = vld [vmem:[#allocation5 + $0xd8] sm:$0xff]
    %v124 = vld [vmem:[#allocation5 + $0xe0] sm:$0xff]
    %v125 = vld [vmem:[#allocation5 + $0xe8] sm:$0xff]
    %v126 = vld [vmem:[#allocation5 + $0xf0] sm:$0xff]
    %v127 = vld [vmem:[#allocation5 + $0xf8] sm:$0xff]
    %v128 = vld [vmem:[#allocation5 + $0x100] sm:$0xff]
    %v129 = vld [vmem:[#allocation5 + $0x108] sm:$0xff]
    %v130 = vld [vmem:[#allocation5 + $0x110] sm:$0xff]
    %v131 = vld [vmem:[#allocation5 + $0x118] sm:$0xff]
    %v132 = vld [vmem:[#allocation5 + $0x120] sm:$0xff]
    %v133 = vld [vmem:[#allocation5 + $0x128] sm:$0xff]
    %v134 = vld [vmem:[#allocation5 + $0x130] sm:$0xff]
    %v135 = vld [vmem:[#allocation5 + $0x138] sm:$0xff]
    %v136 = vld [vmem:[#allocation5 + $0x140] sm:$0xff]
    %v137 = vld [vmem:[#allocation5 + $0x148] sm:$0xff]
    %v138 = vld [vmem:[#allocation5 + $0x150] sm:$0xff]
    %v139 = vld [vmem:[#allocation5 + $0x158] sm:$0xff]
    %v140 = vld [vmem:[#allocation5 + $0x160] sm:$0xff]
    %v141 = vld [vmem:[#allocation5 + $0x168] sm:$0xff]
    %v142 = vld [vmem:[#allocation5 + $0x170] sm:$0xff]
    %v143 = vld [vmem:[#allocation5 + $0x178] sm:$0xff]
    %v144 = vld [vmem:[#allocation5 + $0x180] sm:$0xff]
    %v145 = vld [vmem:[#allocation5 + $0x188] sm:$0xff]
    %v146 = vld [vmem:[#allocation5 + $0x190] sm:$0xff]
    %v147 = vld [vmem:[#allocation5 + $0x198] sm:$0xff]
    %v148 = vld [vmem:[#allocation5 + $0x1a0] sm:$0xff]
    %v149 = vld [vmem:[#allocation5 + $0x1a8] sm:$0xff]
    %v150 = vld [vmem:[#allocation5 + $0x1b0] sm:$0xff]
    %v151 = vld [vmem:[#allocation5 + $0x1b8] sm:$0xff]
    %v152 = vld [vmem:[#allocation5 + $0x1c0] sm:$0xff]
    %v153 = vld [vmem:[#allocation5 + $0x1c8] sm:$0xff]
    %v154 = vld [vmem:[#allocation5 + $0x1d0] sm:$0xff]
    %v155 = vld [vmem:[#allocation5 + $0x1d8] sm:$0xff]
    %v156 = vld [vmem:[#allocation5 + $0x1e0] sm:$0xff]
    %v157 = vld [vmem:[#allocation5 + $0x1e8] sm:$0xff]
    %v158 = vld [vmem:[#allocation5 + $0x1f0] sm:$0xff]
    %v159 = vld [vmem:[#allocation5 + $0x1f8] sm:$0xff]
    %v160 = vld [vmem:[#allocation5 + $0x200] sm:$0xff]
    %v161 = vld [vmem:[#allocation5 + $0x208] sm:$0xff]
    %v162 = vld [vmem:[#allocation5 + $0x210] sm:$0xff]
    %v163 = vld [vmem:[#allocation5 + $0x218] sm:$0xff]
    %v164 = vld [vmem:[#allocation5 + $0x220] sm:$0xff]
    %v165 = vld [vmem:[#allocation5 + $0x228] sm:$0xff]
    %v166 = vld [vmem:[#allocation5 + $0x230] sm:$0xff]
    %v167 = vld [vmem:[#allocation5 + $0x238] sm:$0xff]
    %v168 = vld [vmem:[#allocation5 + $0x240] sm:$0xff]
    %v169 = vld [vmem:[#allocation5 + $0x248] sm:$0xff]
    %v170 = vld [vmem:[#allocation5 + $0x250] sm:$0xff]
    %v171 = vld [vmem:[#allocation5 + $0x258] sm:$0xff]
    %v172 = vld [vmem:[#allocation5 + $0x260] sm:$0xff]
    %v173 = vld [vmem:[#allocation5 + $0x268] sm:$0xff]
    %v174 = vld [vmem:[#allocation5 + $0x270] sm:$0xff]
    %v175 = vld [vmem:[#allocation5 + $0x278] sm:$0xff]
    %v176 = vld [vmem:[#allocation5 + $0x280] sm:$0xff]
    %v177 = vld [vmem:[#allocation5 + $0x288] sm:$0xff]
    %v178 = vld [vmem:[#allocation5 + $0x290] sm:$0xff]
    %v179 = vld [vmem:[#allocation5 + $0x298] sm:$0xff]
    %v180 = vld [vmem:[#allocation5 + $0x2a0] sm:$0xff]
    %v181 = vld [vmem:[#allocation5 + $0x2a8] sm:$0xff]
    %v182 = vld [vmem:[#allocation5 + $0x2b0] sm:$0xff]
    %v183 = vld [vmem:[#allocation5 + $0x2b8] sm:$0xff]
    %v184 = vld [vmem:[#allocation5 + $0x2c0] sm:$0xff]
    %v185 = vld [vmem:[#allocation5 + $0x2c8] sm:$0xff]
    %v186 = vld [vmem:[#allocation5 + $0x2d0] sm:$0xff]
    %v187 = vld [vmem:[#allocation5 + $0x2d8] sm:$0xff]
    %v188 = vld [vmem:[#allocation5 + $0x2e0] sm:$0xff]
    %v189 = vld [vmem:[#allocation5 + $0x2e8] sm:$0xff]
    %v190 = vld [vmem:[#allocation5 + $0x2f0] sm:$0xff]
    %v191 = vld [vmem:[#allocation5 + $0x2f8] sm:$0xff]
    %v192 = vld [vmem:[#allocation5 + $0x300] sm:$0xff]
    %v193 = vld [vmem:[#allocation5 + $0x308] sm:$0xff]
    %v194 = vld [vmem:[%s2] sm:$0x1]
    %v196 = vlaneseq
    %v197 = vshrl.u32 %v196, 7
    %v198 = vsub.s32 0, %v197
    %v199 = vrot.slane %v194, %v198
    %vm201 = vcmask 130048
    %v203 = vsel %vm201, %v88, 0
    %v206 = vsel %vm201, %v95, 0
    %208 = vmatprep.subr.mxu0 0.0
    %209 = vmatpush1.msra.mxu0 %v96
    %210 = vmatprep.subr.mxu0 0.0
    %211 = vmatpush1.msra.mxu0 %v97
    %212 = vmatprep.subr.mxu0 0.0
    %213 = vmatpush1.msra.mxu0 %v98
    %214 = vmatprep.subr.mxu0 0.0
    %215 = vmatpush1.msra.mxu0 %v99
    %216 = vmatprep.subr.mxu0 0.0
    %217 = vmatpush1.msra.mxu0 %v100
    %218 = vmatprep.subr.mxu0 0.0
    %219 = vmatpush1.msra.mxu0 %v101
    %220 = vmatprep.subr.mxu0 0.0
    %221 = vmatpush1.msra.mxu0 %v102
    %222 = vmatprep.subr.mxu0 0.0
    %223 = vmatpush1.msra.mxu0 %v103
    %224 = vmatprep.subr.mxu0 0.0
    %225 = vmatpush1.msra.mxu0 %v104
    %226 = vmatprep.subr.mxu0 0.0
    %227 = vmatpush1.msra.mxu0 %v105
    %228 = vmatprep.subr.mxu0 0.0
    %229 = vmatpush1.msra.mxu0 %v106
    %230 = vmatprep.subr.mxu0 0.0
    %231 = vmatpush1.msra.mxu0 %v107
    %232 = vmatprep.subr.mxu0 0.0
    %233 = vmatpush1.msra.mxu0 %v108
    %234 = vmatprep.subr.mxu0 0.0
    %235 = vmatpush1.msra.mxu0 %v109
    %236 = vmatprep.subr.mxu0 0.0
    %237 = vmatpush1.msra.mxu0 %v110
    %238 = vmatprep.subr.mxu0 0.0
    %239 = vmatpush1.msra.mxu0 %v111
    %240 = vmatprep.subr.mxu0 0.0
    %241 = vmatpush1.msra.mxu0 %v112
    %242 = vmatprep.subr.mxu0 0.0
    %243 = vmatpush1.msra.mxu0 %v113
    %244 = vmatprep.subr.mxu0 0.0
    %245 = vmatpush1.msra.mxu0 %v114
    %246 = vmatprep.subr.mxu0 0.0
    %247 = vmatpush1.msra.mxu0 %v115
    %248 = vmatprep.subr.mxu0 0.0
    %249 = vmatpush1.msra.mxu0 %v116
    %250 = vmatprep.subr.mxu0 0.0
    %251 = vmatpush1.msra.mxu0 %v117
    %252 = vmatprep.subr.mxu0 0.0
    %253 = vmatpush1.msra.mxu0 %v118
    %254 = vmatprep.subr.mxu0 0.0
    %255 = vmatpush1.msra.mxu0 %v119
    %256 = vmatprep.subr.mxu0 0.0
    %257 = vmatpush1.msra.mxu0 %v120
    %258 = vmatprep.subr.mxu0 0.0
    %259 = vmatpush1.msra.mxu0 %v121
    %260 = vmatprep.subr.mxu0 0.0
    %261 = vmatpush1.msra.mxu0 %v122
    %262 = vmatprep.subr.mxu0 0.0
    %263 = vmatpush1.msra.mxu0 %v123
    %264 = vmatprep.subr.mxu0 0.0
    %265 = vmatpush1.msra.mxu0 %v124
    %266 = vmatprep.subr.mxu0 0.0
    %267 = vmatpush1.msra.mxu0 %v125
    %268 = vmatprep.subr.mxu0 0.0
    %269 = vmatpush1.msra.mxu0 %v126
    %270 = vmatprep.subr.mxu0 0.0
    %271 = vmatpush1.msra.mxu0 %v127
    %272 = vmatprep.mubr.f32.mxu0 %v83
    %273 = vmatmul.mubr.f32.gmra.mrb[0].mxu0 %v82
    %v274 = vpop.f32.mrb[0].mxu0
    %v275 = vadd.f32 %v199, %v274
    %v276 = vpop.f32.mrb[0].mxu0
    %277 = vmatprep.mubr.f32.mxu0 %v90
    %278 = vmatmul.mubr.f32.gmra.mrb[0].mxu0 %v89
    %v279 = vpop.f32.mrb[0].mxu0
    %v280 = vadd.f32 %v199, %v279
    %v281 = vpop.f32.mrb[0].mxu0
    %282 = vdwg.mxu0
    %283 = vmatprep.subr.mxu0 0.0
    %284 = vmatpush1.msra.mxu0 %v128
    %285 = vmatprep.subr.mxu0 0.0
    %286 = vmatpush1.msra.mxu0 %v129
    %287 = vmatprep.subr.mxu0 0.0
    %288 = vmatpush1.msra.mxu0 %v130
    %289 = vmatprep.subr.mxu0 0.0
    %290 = vmatpush1.msra.mxu0 %v131
    %291 = vmatprep.subr.mxu0 0.0
    %292 = vmatpush1.msra.mxu0 %v132
    %293 = vmatprep.subr.mxu0 0.0
    %294 = vmatpush1.msra.mxu0 %v133
    %295 = vmatprep.subr.mxu0 0.0
    %296 = vmatpush1.msra.mxu0 %v134
    %297 = vmatprep.subr.mxu0 0.0
    %298 = vmatpush1.msra.mxu0 %v135
    %299 = vmatprep.subr.mxu0 0.0
    %300 = vmatpush1.msra.mxu0 %v136
    %301 = vmatprep.subr.mxu0 0.0
    %302 = vmatpush1.msra.mxu0 %v137
    %303 = vmatprep.subr.mxu0 0.0
    %304 = vmatpush1.msra.mxu0 %v138
    %305 = vmatprep.subr.mxu0 0.0
    %306 = vmatpush1.msra.mxu0 %v139
    %307 = vmatprep.subr.mxu0 0.0
    %308 = vmatpush1.msra.mxu0 %v140
    %309 = vmatprep.subr.mxu0 0.0
    %310 = vmatpush1.msra.mxu0 %v141
    %311 = vmatprep.subr.mxu0 0.0
    %312 = vmatpush1.msra.mxu0 %v142
    %313 = vmatprep.subr.mxu0 0.0
    %314 = vmatpush1.msra.mxu0 %v143
    %315 = vmatprep.subr.mxu0 0.0
    %316 = vmatpush1.msra.mxu0 %v144
    %317 = vmatprep.subr.mxu0 0.0
    %318 = vmatpush1.msra.mxu0 %v145
    %319 = vmatprep.subr.mxu0 0.0
    %320 = vmatpush1.msra.mxu0 %v146
    %321 = vmatprep.subr.mxu0 0.0
    %322 = vmatpush1.msra.mxu0 %v147
    %323 = vmatprep.subr.mxu0 0.0
    %324 = vmatpush1.msra.mxu0 %v148
    %325 = vmatprep.subr.mxu0 0.0
    %326 = vmatpush1.msra.mxu0 %v149
    %327 = vmatprep.subr.mxu0 0.0
    %328 = vmatpush1.msra.mxu0 %v150
    %329 = vmatprep.subr.mxu0 0.0
    %330 = vmatpush1.msra.mxu0 %v151
    %331 = vmatprep.subr.mxu0 0.0
    %332 = vmatpush1.msra.mxu0 %v152
    %333 = vmatprep.subr.mxu0 0.0
    %334 = vmatpush1.msra.mxu0 %v153
    %335 = vmatprep.subr.mxu0 0.0
    %336 = vmatpush1.msra.mxu0 %v154
    %337 = vmatprep.subr.mxu0 0.0
    %338 = vmatpush1.msra.mxu0 %v155
    %339 = vmatprep.subr.mxu0 0.0
    %340 = vmatpush1.msra.mxu0 %v156
    %341 = vmatprep.subr.mxu0 0.0
    %342 = vmatpush1.msra.mxu0 %v157
    %343 = vmatprep.subr.mxu0 0.0
    %344 = vmatpush1.msra.mxu0 %v158
    %345 = vmatprep.subr.mxu0 0.0
    %346 = vmatpush1.msra.mxu0 %v159
    %347 = vmatprep.mubr.f32.mxu0 %v85
    %348 = vmatmul.mubr.f32.gmra.mrb[0].mxu0 %v84
    %v349 = vpop.f32.mrb[0].mxu0
    %v350 = vadd.f32 %v275, %v349
    %v351 = vpop.f32.mrb[0].mxu0
    %352 = vmatprep.mubr.f32.mxu0 %v92
    %353 = vmatmul.mubr.f32.gmra.mrb[0].mxu0 %v91
    %v354 = vpop.f32.mrb[0].mxu0
    %v355 = vadd.f32 %v280, %v354
    %v356 = vpop.f32.mrb[0].mxu0
    %357 = vdwg.mxu0
    %358 = vmatprep.subr.mxu0 0.0
    %359 = vmatpush1.msra.mxu0 %v160
    %360 = vmatprep.subr.mxu0 0.0
    %361 = vmatpush1.msra.mxu0 %v161
    %362 = vmatprep.subr.mxu0 0.0
    %363 = vmatpush1.msra.mxu0 %v162
    %364 = vmatprep.subr.mxu0 0.0
    %365 = vmatpush1.msra.mxu0 %v163
    %366 = vmatprep.subr.mxu0 0.0
    %367 = vmatpush1.msra.mxu0 %v164
    %368 = vmatprep.subr.mxu0 0.0
    %369 = vmatpush1.msra.mxu0 %v165
    %370 = vmatprep.subr.mxu0 0.0
    %371 = vmatpush1.msra.mxu0 %v166
    %372 = vmatprep.subr.mxu0 0.0
    %373 = vmatpush1.msra.mxu0 %v167
    %374 = vmatprep.subr.mxu0 0.0
    %375 = vmatpush1.msra.mxu0 %v168
    %376 = vmatprep.subr.mxu0 0.0
    %377 = vmatpush1.msra.mxu0 %v169
    %378 = vmatprep.subr.mxu0 0.0
    %379 = vmatpush1.msra.mxu0 %v170
    %380 = vmatprep.subr.mxu0 0.0
    %381 = vmatpush1.msra.mxu0 %v171
    %382 = vmatprep.subr.mxu0 0.0
    %383 = vmatpush1.msra.mxu0 %v172
    %384 = vmatprep.subr.mxu0 0.0
    %385 = vmatpush1.msra.mxu0 %v173
    %386 = vmatprep.subr.mxu0 0.0
    %387 = vmatpush1.msra.mxu0 %v174
    %388 = vmatprep.subr.mxu0 0.0
    %389 = vmatpush1.msra.mxu0 %v175
    %390 = vmatprep.subr.mxu0 0.0
    %391 = vmatpush1.msra.mxu0 %v176
    %392 = vmatprep.subr.mxu0 0.0
    %393 = vmatpush1.msra.mxu0 %v177
    %394 = vmatprep.subr.mxu0 0.0
    %395 = vmatpush1.msra.mxu0 %v178
    %396 = vmatprep.subr.mxu0 0.0
    %397 = vmatpush1.msra.mxu0 %v179
    %398 = vmatprep.subr.mxu0 0.0
    %399 = vmatpush1.msra.mxu0 %v180
    %400 = vmatprep.subr.mxu0 0.0
    %401 = vmatpush1.msra.mxu0 %v181
    %402 = vmatprep.subr.mxu0 0.0
    %403 = vmatpush1.msra.mxu0 %v182
    %404 = vmatprep.subr.mxu0 0.0
    %405 = vmatpush1.msra.mxu0 %v183
    %406 = vmatprep.subr.mxu0 0.0
    %407 = vmatpush1.msra.mxu0 %v184
    %408 = vmatprep.subr.mxu0 0.0
    %409 = vmatpush1.msra.mxu0 %v185
    %410 = vmatprep.subr.mxu0 0.0
    %411 = vmatpush1.msra.mxu0 %v186
    %412 = vmatprep.subr.mxu0 0.0
    %413 = vmatpush1.msra.mxu0 %v187
    %414 = vmatprep.subr.mxu0 0.0
    %415 = vmatpush1.msra.mxu0 %v188
    %416 = vmatprep.subr.mxu0 0.0
    %417 = vmatpush1.msra.mxu0 %v189
    %418 = vmatprep.subr.mxu0 0.0
    %419 = vmatpush1.msra.mxu0 %v190
    %420 = vmatprep.subr.mxu0 0.0
    %421 = vmatpush1.msra.mxu0 %v191
    %422 = vmatprep.mubr.f32.mxu0 %v87
    %423 = vmatmul.mubr.f32.gmra.mrb[0].mxu0 %v86
    %v424 = vpop.f32.mrb[0].mxu0
    %v425 = vadd.f32 %v350, %v424
    %v426 = vpop.f32.mrb[0].mxu0
    %427 = vmatprep.mubr.f32.mxu0 %v94
    %428 = vmatmul.mubr.f32.gmra.mrb[0].mxu0 %v93
    %v429 = vpop.f32.mrb[0].mxu0
    %v430 = vadd.f32 %v355, %v429
    %v431 = vpop.f32.mrb[0].mxu0
    %432 = vdwg.mxu0
    %433 = vmatprep.subr.mxu0 0.0
    %434 = vmatpush1.msra.mxu0 %v192
    %435 = vmatprep.subr.mxu0 0.0
    %436 = vmatpush1.msra.mxu0 %v193
    %437 = vmatprep.subr.mxu0 0.0
    %438 = vmatpush1.msra.mxu0 0.0
    %439 = vmatprep.subr.mxu0 0.0
    %440 = vmatpush1.msra.mxu0 0.0
    %441 = vmatprep.subr.mxu0 0.0
    %442 = vmatpush1.msra.mxu0 0.0
    %443 = vmatprep.subr.mxu0 0.0
    %444 = vmatpush1.msra.mxu0 0.0
    %445 = vmatprep.subr.mxu0 0.0
    %446 = vmatpush1.msra.mxu0 0.0
    %447 = vmatprep.subr.mxu0 0.0
    %448 = vmatpush1.msra.mxu0 0.0
    %449 = vmatprep.subr.mxu0 0.0
    %450 = vmatpush1.msra.mxu0 0.0
    %451 = vmatprep.subr.mxu0 0.0
    %452 = vmatpush1.msra.mxu0 0.0
    %453 = vmatprep.subr.mxu0 0.0
    %454 = vmatpush1.msra.mxu0 0.0
    %455 = vmatprep.subr.mxu0 0.0
    %456 = vmatpush1.msra.mxu0 0.0
    %457 = vmatprep.subr.mxu0 0.0
    %458 = vmatpush1.msra.mxu0 0.0
    %459 = vmatprep.subr.mxu0 0.0
    %460 = vmatpush1.msra.mxu0 0.0
    %461 = vmatprep.subr.mxu0 0.0
    %462 = vmatpush1.msra.mxu0 0.0
    %463 = vmatprep.subr.mxu0 0.0
    %464 = vmatpush1.msra.mxu0 0.0
    %465 = vmatprep.subr.mxu0 0.0
    %466 = vmatpush1.msra.mxu0 0.0
    %467 = vmatprep.subr.mxu0 0.0
    %468 = vmatpush1.msra.mxu0 0.0
    %469 = vmatprep.subr.mxu0 0.0
    %470 = vmatpush1.msra.mxu0 0.0
    %471 = vmatprep.subr.mxu0 0.0
    %472 = vmatpush1.msra.mxu0 0.0
    %473 = vmatprep.subr.mxu0 0.0
    %474 = vmatpush1.msra.mxu0 0.0
    %475 = vmatprep.subr.mxu0 0.0
    %476 = vmatpush1.msra.mxu0 0.0
    %477 = vmatprep.subr.mxu0 0.0
    %478 = vmatpush1.msra.mxu0 0.0
    %479 = vmatprep.subr.mxu0 0.0
    %480 = vmatpush1.msra.mxu0 0.0
    %481 = vmatprep.subr.mxu0 0.0
    %482 = vmatpush1.msra.mxu0 0.0
    %483 = vmatprep.subr.mxu0 0.0
    %484 = vmatpush1.msra.mxu0 0.0
    %485 = vmatprep.subr.mxu0 0.0
    %486 = vmatpush1.msra.mxu0 0.0
    %487 = vmatprep.subr.mxu0 0.0
    %488 = vmatpush1.msra.mxu0 0.0
    %489 = vmatprep.subr.mxu0 0.0
    %490 = vmatpush1.msra.mxu0 0.0
    %491 = vmatprep.subr.mxu0 0.0
    %492 = vmatpush1.msra.mxu0 0.0
    %493 = vmatprep.subr.mxu0 0.0
    %494 = vmatpush1.msra.mxu0 0.0
    %495 = vmatprep.subr.mxu0 0.0
    %496 = vmatpush1.msra.mxu0 0.0
    %497 = vmatprep.mubr.f32.mxu0 0.0
    %498 = vmatmul.mubr.f32.gmra.mrb[0].mxu0 %v203
    %v499 = vpop.f32.mrb[0].mxu0
    %v500 = vadd.f32 %v425, %v499
    %v501 = vpop.f32.mrb[0].mxu0
    %502 = vmatprep.mubr.f32.mxu0 0.0
    %503 = vmatmul.mubr.f32.gmra.mrb[0].mxu0 %v206
    %v504 = vpop.f32.mrb[0].mxu0
    %v505 = vadd.f32 %v430, %v504
    %v506 = vpop.f32.mrb[0].mxu0
    %507 = vdwg.mxu0
    %v508 = vmax.f32 %v500, 0.0
    %v509 = vmax.f32 %v505, 0.0
    %v510 = vld [vmem:[#allocation7] sm:$0xff]
    %v511 = vld [vmem:[#allocation7 + $0x8] sm:$0xff]
    %v512 = vld [vmem:[#allocation7 + $0x10] sm:$0xff]
    %v513 = vld [vmem:[#allocation7 + $0x18] sm:$0xff]
    %v514 = vld [vmem:[#allocation7 + $0x20] sm:$0xff]
    %v515 = vld [vmem:[#allocation7 + $0x28] sm:$0xff]
    %v516 = vld [vmem:[#allocation7 + $0x30] sm:$0xff]
    %v517 = vld [vmem:[#allocation7 + $0x38] sm:$0xff]
    %v518 = vld [vmem:[#allocation7 + $0x40] sm:$0xff]
    %v519 = vld [vmem:[#allocation7 + $0x48] sm:$0xff]
    %v520 = vld [vmem:[#allocation7 + $0x50] sm:$0xff]
    %v521 = vld [vmem:[#allocation7 + $0x58] sm:$0xff]
    %v522 = vld [vmem:[#allocation7 + $0x60] sm:$0xff]
    %v523 = vld [vmem:[#allocation7 + $0x68] sm:$0xff]
    %v524 = vld [vmem:[#allocation7 + $0x70] sm:$0xff]
    %v525 = vld [vmem:[#allocation7 + $0x78] sm:$0xff]
    %v526 = vld [vmem:[%s4] sm:$0x1]
    %v528 = vlaneseq
    %v529 = vshrl.u32 %v528, 7
    %v530 = vsub.s32 0, %v529
    %v531 = vrot.slane %v526, %v530
    %533 = vmatprep.subr.mxu0 0.0
    %534 = vmatpush1.msra.mxu0 %v510
    %535 = vmatprep.subr.mxu0 0.0
    %536 = vmatpush1.msra.mxu0 %v511
    %537 = vmatprep.subr.mxu0 0.0
    %538 = vmatpush1.msra.mxu0 %v512
    %539 = vmatprep.subr.mxu0 0.0
    %540 = vmatpush1.msra.mxu0 %v513
    %541 = vmatprep.subr.mxu0 0.0
    %542 = vmatpush1.msra.mxu0 %v514
    %543 = vmatprep.subr.mxu0 0.0
    %544 = vmatpush1.msra.mxu0 %v515
    %545 = vmatprep.subr.mxu0 0.0
    %546 = vmatpush1.msra.mxu0 %v516
    %547 = vmatprep.subr.mxu0 0.0
    %548 = vmatpush1.msra.mxu0 %v517
    %549 = vmatprep.subr.mxu0 0.0
    %550 = vmatpush1.msra.mxu0 %v518
    %551 = vmatprep.subr.mxu0 0.0
    %552 = vmatpush1.msra.mxu0 %v519
    %553 = vmatprep.subr.mxu0 0.0
    %554 = vmatpush1.msra.mxu0 %v520
    %555 = vmatprep.subr.mxu0 0.0
    %556 = vmatpush1.msra.mxu0 %v521
    %557 = vmatprep.subr.mxu0 0.0
    %558 = vmatpush1.msra.mxu0 %v522
    %559 = vmatprep.subr.mxu0 0.0
    %560 = vmatpush1.msra.mxu0 %v523
    %561 = vmatprep.subr.mxu0 0.0
    %562 = vmatpush1.msra.mxu0 %v524
    %563 = vmatprep.subr.mxu0 0.0
    %564 = vmatpush1.msra.mxu0 %v525
    %565 = vmatprep.subr.mxu0 0.0
    %566 = vmatpush1.msra.mxu0 0.0
    %567 = vmatprep.subr.mxu0 0.0
    %568 = vmatpush1.msra.mxu0 0.0
    %569 = vmatprep.subr.mxu0 0.0
    %570 = vmatpush1.msra.mxu0 0.0
    %571 = vmatprep.subr.mxu0 0.0
    %572 = vmatpush1.msra.mxu0 0.0
    %573 = vmatprep.subr.mxu0 0.0
    %574 = vmatpush1.msra.mxu0 0.0
    %575 = vmatprep.subr.mxu0 0.0
    %576 = vmatpush1.msra.mxu0 0.0
    %577 = vmatprep.subr.mxu0 0.0
    %578 = vmatpush1.msra.mxu0 0.0
    %579 = vmatprep.subr.mxu0 0.0
    %580 = vmatpush1.msra.mxu0 0.0
    %581 = vmatprep.subr.mxu0 0.0
    %582 = vmatpush1.msra.mxu0 0.0
    %583 = vmatprep.subr.mxu0 0.0
    %584 = vmatpush1.msra.mxu0 0.0
    %585 = vmatprep.subr.mxu0 0.0
    %586 = vmatpush1.msra.mxu0 0.0
    %587 = vmatprep.subr.mxu0 0.0
    %588 = vmatpush1.msra.mxu0 0.0
    %589 = vmatprep.subr.mxu0 0.0
    %590 = vmatpush1.msra.mxu0 0.0
    %591 = vmatprep.subr.mxu0 0.0
    %592 = vmatpush1.msra.mxu0 0.0
    %593 = vmatprep.subr.mxu0 0.0
    %594 = vmatpush1.msra.mxu0 0.0
    %595 = vmatprep.subr.mxu0 0.0
    %596 = vmatpush1.msra.mxu0 0.0
    %597 = vmatprep.mubr.f32.mxu0 0.0
    %598 = vmatmul.mubr.f32.gmra.mrb[0].mxu0 %v508
    %v599 = vpop.f32.mrb[0].mxu0
    %v600 = vadd.f32 %v531, %v599
    %v601 = vpop.f32.mrb[0].mxu0
    %602 = vmatprep.mubr.f32.mxu0 0.0
    %603 = vmatmul.mubr.f32.gmra.mrb[0].mxu0 %v509
    %v604 = vpop.f32.mrb[0].mxu0
    %v605 = vadd.f32 %v531, %v604
    %v606 = vpop.f32.mrb[0].mxu0
    %607 = vdwg.mxu0
    %v608 = vmax.f32 %v600, 0.0
    %v609 = vmax.f32 %v605, 0.0
    %v610 = vld [vmem:[#allocation8] sm:$0xff]
    %v611 = vld [vmem:[#allocation8 + $0x8] sm:$0xff]
    %v612 = vld [vmem:[#allocation8 + $0x10] sm:$0xff]
    %v613 = vld [vmem:[#allocation8 + $0x18] sm:$0xff]
    %v614 = vld [vmem:[#allocation8 + $0x20] sm:$0xff]
    %v615 = vld [vmem:[#allocation8 + $0x28] sm:$0xff]
    %v616 = vld [vmem:[#allocation8 + $0x30] sm:$0xff]
    %v617 = vld [vmem:[#allocation8 + $0x38] sm:$0xff]
    %v618 = vld [vmem:[#allocation8 + $0x40] sm:$0xff]
    %v619 = vld [vmem:[#allocation8 + $0x48] sm:$0xff]
    %v620 = vld [vmem:[#allocation8 + $0x50] sm:$0xff]
    %v621 = vld [vmem:[#allocation8 + $0x58] sm:$0xff]
    %v622 = vld [vmem:[#allocation8 + $0x60] sm:$0xff]
    %v623 = vld [vmem:[#allocation8 + $0x68] sm:$0xff]
    %v624 = vld [vmem:[#allocation8 + $0x70] sm:$0xff]
    %v625 = vld [vmem:[#allocation8 + $0x78] sm:$0xff]
    %v626 = vld [vmem:[%s6] sm:$0x1]
    %v628 = vlaneseq
    %v629 = vshrl.u32 %v628, 7
    %v630 = vsub.s32 0, %v629
    %v631 = vrot.slane %v626, %v630
    %633 = vmatprep.subr.mxu0 0.0
    %634 = vmatpush1.msra.mxu0 %v610
    %635 = vmatprep.subr.mxu0 0.0
    %636 = vmatpush1.msra.mxu0 %v611
    %637 = vmatprep.subr.mxu0 0.0
    %638 = vmatpush1.msra.mxu0 %v612
    %639 = vmatprep.subr.mxu0 0.0
    %640 = vmatpush1.msra.mxu0 %v613
    %641 = vmatprep.subr.mxu0 0.0
    %642 = vmatpush1.msra.mxu0 %v614
    %643 = vmatprep.subr.mxu0 0.0
    %644 = vmatpush1.msra.mxu0 %v615
    %645 = vmatprep.subr.mxu0 0.0
    %646 = vmatpush1.msra.mxu0 %v616
    %647 = vmatprep.subr.mxu0 0.0
    %648 = vmatpush1.msra.mxu0 %v617
    %649 = vmatprep.subr.mxu0 0.0
    %650 = vmatpush1.msra.mxu0 %v618
    %651 = vmatprep.subr.mxu0 0.0
    %652 = vmatpush1.msra.mxu0 %v619
    %653 = vmatprep.subr.mxu0 0.0
    %654 = vmatpush1.msra.mxu0 %v620
    %655 = vmatprep.subr.mxu0 0.0
    %656 = vmatpush1.msra.mxu0 %v621
    %657 = vmatprep.subr.mxu0 0.0
    %658 = vmatpush1.msra.mxu0 %v622
    %659 = vmatprep.subr.mxu0 0.0
    %660 = vmatpush1.msra.mxu0 %v623
    %661 = vmatprep.subr.mxu0 0.0
    %662 = vmatpush1.msra.mxu0 %v624
    %663 = vmatprep.subr.mxu0 0.0
    %664 = vmatpush1.msra.mxu0 %v625
    %665 = vmatprep.subr.mxu0 0.0
    %666 = vmatpush1.msra.mxu0 0.0
    %667 = vmatprep.subr.mxu0 0.0
    %668 = vmatpush1.msra.mxu0 0.0
    %669 = vmatprep.subr.mxu0 0.0
    %670 = vmatpush1.msra.mxu0 0.0
    %671 = vmatprep.subr.mxu0 0.0
    %672 = vmatpush1.msra.mxu0 0.0
    %673 = vmatprep.subr.mxu0 0.0
    %674 = vmatpush1.msra.mxu0 0.0
    %675 = vmatprep.subr.mxu0 0.0
    %676 = vmatpush1.msra.mxu0 0.0
    %677 = vmatprep.subr.mxu0 0.0
    %678 = vmatpush1.msra.mxu0 0.0
    %679 = vmatprep.subr.mxu0 0.0
    %680 = vmatpush1.msra.mxu0 0.0
    %681 = vmatprep.subr.mxu0 0.0
    %682 = vmatpush1.msra.mxu0 0.0
    %683 = vmatprep.subr.mxu0 0.0
    %684 = vmatpush1.msra.mxu0 0.0
    %685 = vmatprep.subr.mxu0 0.0
    %686 = vmatpush1.msra.mxu0 0.0
    %687 = vmatprep.subr.mxu0 0.0
    %688 = vmatpush1.msra.mxu0 0.0
    %689 = vmatprep.subr.mxu0 0.0
    %690 = vmatpush1.msra.mxu0 0.0
    %691 = vmatprep.subr.mxu0 0.0
    %692 = vmatpush1.msra.mxu0 0.0
    %693 = vmatprep.subr.mxu0 0.0
    %694 = vmatpush1.msra.mxu0 0.0
    %695 = vmatprep.subr.mxu0 0.0
    %696 = vmatpush1.msra.mxu0 0.0
    %697 = vmatprep.mubr.f32.mxu0 0.0
    %698 = vmatmul.mubr.f32.gmra.mrb[0].mxu0 %v608
    %v699 = vpop.f32.mrb[0].mxu0
    %v700 = vadd.f32 %v631, %v699
    %v701 = vpop.f32.mrb[0].mxu0
    %702 = vmatprep.mubr.f32.mxu0 0.0
    %703 = vmatmul.mubr.f32.gmra.mrb[0].mxu0 %v609
    %v704 = vpop.f32.mrb[0].mxu0
    %v705 = vadd.f32 %v631, %v704
    %v706 = vpop.f32.mrb[0].mxu0
    %707 = vdwg.mxu0
    %708 = vst [vmem:[#allocation10] sm:$0xff] %v700
    %709 = vst [vmem:[#allocation10 + $0x8] sm:$0xff] %v705
    // Predicated region
    $region46: #{tpu_custom_call.1} parent=1 // pred_check
      _
    $region47: #{tpu_custom_call.1} parent=1 // pred_check_branch
      %711 = sbr.rel (0) target = $region49
    $region48: #{tpu_custom_call.1} parent=1 // pred_region
      %s713 = ssub.s32 256, 256
      %714 = vsyncadd [#allocation4], %s713
      %s715 = sshll.u32 [#allocation10], 4
      %s716 = int_to_ptr.vmem [resolvable:$true] %s715
      %721 = dma.vmem_to_hbm [thread:$0]  %s716, 256, %s7, [#allocation4], 128, 128, 8
    $region49: #{tpu_custom_call.1} parent=1 // pred_fallthru
      _
    // Predicated region
    $region50: #{tpu_custom_call.1} parent=1 // pred_check
      _
    $region51: #{tpu_custom_call.1} parent=1 // pred_check_branch
      %723 = sbr.rel (0) target = $region53
    $region52: #{tpu_custom_call.1} parent=1 // pred_region
      %724 = dma.done [#allocation4], 256
    $region53: #{tpu_custom_call.1} parent=1 // pred_fallthru
      _
    %725 = vsyncpa [#allocation3], 1
    %726 = vsyncpa [#allocation6], 1
    %727 = vsyncpa [#allocation9], 1
    %728 = vsyncpa [#allocation4], 1

</llo_original>
